<compile_context>
chip_gen: v7x
topology: tpu7x:2x2x1
jax: 0.10.0
libtpu: 0.0.40
codegen_flags: <defaults>
</compile_context>

<pallas_src>
import functools

import jax
import jax.numpy as jnp
from jax.experimental import pallas as pl
from jax.experimental.pallas import tpu as pltpu

_EPS = 1e-6            # torch F.pairwise_distance default eps (added per element)
_OUT_TILE = (8, 128)   # one native f32 tile of per-block partial sums
_OUT_ELEMS = _OUT_TILE[0] * _OUT_TILE[1]
_MAX_ROWS = 16384      # sanity cap only; budget is the real constraint


def _contrastive_loss_kernel(o1_ref, o2_ref, label_ref, part_ref, *,
                             margin, batch, rows, ragged):
    i = pl.program_id(0)

    # Upcast AFTER the native-dtype DMA (f32 math works on every TPU gen).
    o1 = o1_ref[...].astype(jnp.float32)                       # (rows, D)
    o2 = o2_ref[...].astype(jnp.float32)                       # (rows, D)
    label = label_ref[...].astype(jnp.float32)                 # (1, rows) lane-dense

    diff = o1 - o2 + _EPS                                      # torch eps semantics
    dist_sq = jnp.sum(diff * diff, axis=-1, keepdims=True)     # (rows, 1)
    dist = jnp.sqrt(dist_sq)                                   # EUP slot, ~free
    hinge = jnp.maximum(margin - dist, 0.0)
    # (1-l)*d^2 + l*h^2 == d^2 + l*(h^2 - d^2): the label-weighted part becomes
    # a (1,rows)x(rows,1) dot, so the lane-dense label needs no relayout.
    delta = hinge * hinge - dist_sq                            # (rows, 1)

    def emit(dsq, dlt, lab):
        base = jnp.sum(dsq)                                    # scalar
        weighted = jnp.dot(lab, dlt, preferred_element_type=jnp.float32)  # (1, 1)
        partial = base + weighted[0, 0]
        # Lane-dense (8,128) tile per grid step -> unmasked vector stores and a
        # fully independent ("parallel") batch axis.
        part_ref[...] = jnp.broadcast_to(partial, part_ref.shape)

    if ragged:
        last = pl.num_programs(0) - 1

        @pl.when(i != last)
        def _():
            emit(dist_sq, delta, label)

        @pl.when(i == last)
        def _():
            # Only the last block can contain rows past the true batch size.
            # Mask the per-row terms AND the label (padded data may be NaN/Inf).
            row_ids = jax.lax.broadcasted_iota(jnp.int32, dist_sq.shape, 0) + i * rows
            lane_ids = jax.lax.broadcasted_iota(jnp.int32, label.shape, 1) + i * rows
            rmask = row_ids < batch
            emit(jnp.where(rmask, dist_sq, 0.0),
                 jnp.where(rmask, delta, 0.0),
                 jnp.where(lane_ids < batch, label, 0.0))
    else:
        emit(dist_sq, delta, label)


def _vmem_limit_bytes():
    # ~3/4 of physical VMEM: ~48 MiB on v7x (64 MiB), ~96 MiB on v5e/v6e (128 MiB).
    cap = 0
    try:
        cap = int(pltpu.get_tpu_info().vmem_capacity_bytes)
    except Exception:
        cap = 0
    if cap <= 0:
        cap = 64 * 1024 * 1024          # conservative fallback (v7x physical)
    return max(32 * 1024 * 1024, min(cap * 3 // 4, 96 * 1024 * 1024))


def _pick_rows(batch, dim, in_itemsize, vmem_limit):
    padded_d = -(-dim // 128) * 128     # VMEM lane padding when D < 128 / not x128
    # Resident VMEM bytes per batch row in one grid step:
    #   2 inputs x 2 double-buffers in native dtype (lane-padded)
    # + ~4 lane-padded f32 elementwise temporaries (o1/o2 upcasts, diff, diff^2)
    # + ~4 (rows,1) f32 per-row temporaries, each padded to a 128-lane vreg row
    # + the lane-dense label (tiny).
    per_row = (2 * 2 * padded_d * in_itemsize
               + 4 * padded_d * 4
               + 4 * 512
               + 16)
    rows = int(vmem_limit * 0.7) // per_row
    rows = min(rows, _MAX_ROWS)
    if rows >= batch:
        return batch                    # single full-extent block (any batch size)
    # 128-aligned: satisfies the lane-dense (1, rows) label block and is
    # sublane-aligned for every input dtype (f32/bf16/int8).
    return max(128, (rows // 128) * 128)


def contrastive_loss(output1, output2, label, margin=1.0, block_rows=None):
    batch, dim = output1.shape
    vmem_limit = _vmem_limit_bytes()
    if block_rows is not None:
        rows = batch if block_rows >= batch else max(128, (block_rows // 128) * 128)
    else:
        rows = _pick_rows(batch, dim, output1.dtype.itemsize, vmem_limit)
    num_blocks = pl.cdiv(batch, rows)
    ragged = (batch % rows) != 0
    label_row = label.reshape(1, batch)            # lane-dense label on the wire

    kernel = functools.partial(_contrastive_loss_kernel, margin=float(margin),
                               batch=batch, rows=rows, ragged=ragged)

    partials = pl.pallas_call(
        kernel,
        out_shape=jax.ShapeDtypeStruct(
            (num_blocks * _OUT_TILE[0], _OUT_TILE[1]), jnp.float32),
        grid_spec=pltpu.PrefetchScalarGridSpec(
            num_scalar_prefetch=0,
            grid=(num_blocks,),
            in_specs=[
                pl.BlockSpec((rows, dim), lambda i: (i, 0)),
                pl.BlockSpec((rows, dim), lambda i: (i, 0)),
                pl.BlockSpec((1, rows), lambda i: (0, i)),
            ],
            out_specs=pl.BlockSpec(_OUT_TILE, lambda i: (i, 0)),
        ),
        compiler_params=pltpu.CompilerParams(
            dimension_semantics=("parallel",),     # shards blocks across TCs on v7x
            vmem_limit_bytes=vmem_limit,
        ),
    )(output1, output2, label_row)

    # Each block wrote its partial replicated across an (8,128) tile.
    return jnp.sum(partials) / (batch * _OUT_ELEMS)


def _reference(output1, output2, label, margin=1.0):
    # Pure-JAX reference mirroring the PyTorch module.
    o1 = output1.astype(jnp.float32)
    o2 = output2.astype(jnp.float32)
    lab = label.astype(jnp.float32)
    d = jnp.sqrt(jnp.sum((o1 - o2 + _EPS) ** 2, axis=-1))
    return jnp.mean((1.0 - lab) * d ** 2
                    + lab * jnp.maximum(margin - d, 0.0) ** 2)


if __name__ == "__main__":
    key = jax.random.PRNGKey(0)

    def make_inputs(k, b, d, dtype):
        k1, k2, k3 = jax.random.split(k, 3)
        o1 = jax.random.normal(k1, (b, d), dtype=jnp.float32).astype(dtype)
        o2 = jax.random.normal(k2, (b, d), dtype=jnp.float32).astype(dtype)
        lab = jax.random.bernoulli(k3, p=0.5, shape=(b,)).astype(jnp.float32)
        return o1, o2, lab

    k0, k1, k2 = jax.random.split(key, 3)

    # 1) Small shape consistent with the module (single full-extent block).
    o1, o2, lab = make_inputs(k0, 8, 32, jnp.float32)
    loss = contrastive_loss(o1, o2, lab)
    jax.block_until_ready(loss)
    ref = _reference(o1, o2, lab)
    assert jnp.allclose(loss, ref, rtol=1e-5, atol=1e-5), (loss, ref)

    # 2) Ragged batch + multi-block grid (exercises pipelining, lane-dense label
    #    blocks and the pl.when-guarded last-block mask).
    o1, o2, lab = make_inputs(k1, 300, 32, jnp.float32)
    loss = contrastive_loss(o1, o2, lab, block_rows=128)
    jax.block_until_ready(loss)
    ref = _reference(o1, o2, lab)
    assert jnp.allclose(loss, ref, rtol=1e-5, atol=1e-5), (loss, ref)

    # 3) Native bf16 on the wire (upcast happens inside the kernel).
    o1, o2, lab = make_inputs(k2, 128, 256, jnp.bfloat16)
    loss = contrastive_loss(o1, o2, lab)
    jax.block_until_ready(loss)
    ref = _reference(o1, o2, lab)
    assert jnp.allclose(loss, ref, rtol=1e-4, atol=1e-4), (loss, ref)

    print("KERNEL_OK")
</pallas_src>

<mosaic_0001>
module attributes {stable_mosaic.version = 11 : i64} {
  func.func @_contrastive_loss_kernel(%arg0: i32, %arg1: memref<8x32xf32, #tpu.memory_space<vmem>>, %arg2: memref<8x32xf32, #tpu.memory_space<vmem>>, %arg3: memref<1x8xf32, #tpu.memory_space<vmem>>, %arg4: memref<8x128xf32, #tpu.memory_space<vmem>>) attributes {dimension_semantics = [#tpu.dimension_semantics<parallel>], iteration_bounds = array<i64: 1>, scalar_prefetch = 0 : i64, scratch_operands = 0 : i64, tpu.core_type = #tpu.core_type<tc>, window_params = [{transform_indices = @transform_0, window_bounds = array<i64: 8, 32>}, {transform_indices = @transform_1, window_bounds = array<i64: 8, 32>}, {transform_indices = @transform_2, window_bounds = array<i64: 1, 8>}, {transform_indices = @transform_3, window_bounds = array<i64: 8, 128>}]} {
    %c0 = arith.constant 0 : index
    %c0_0 = arith.constant 0 : index
    %0 = vector.load %arg1[%c0, %c0_0] : memref<8x32xf32, #tpu.memory_space<vmem>>, vector<8x32xf32>
    %c0_1 = arith.constant 0 : index
    %c0_2 = arith.constant 0 : index
    %1 = vector.load %arg2[%c0_1, %c0_2] : memref<8x32xf32, #tpu.memory_space<vmem>>, vector<8x32xf32>
    %c0_3 = arith.constant 0 : index
    %c0_4 = arith.constant 0 : index
    %2 = vector.load %arg3[%c0_3, %c0_4] : memref<1x8xf32, #tpu.memory_space<vmem>>, vector<1x8xf32>
    %3 = arith.subf %0, %1 : vector<8x32xf32>
    %cst = arith.constant 9.99999997E-7 : f32
    %4 = vector.broadcast %cst : f32 to vector<8x32xf32>
    %5 = arith.addf %3, %4 : vector<8x32xf32>
    %6 = arith.mulf %5, %5 : vector<8x32xf32>
    %cst_5 = arith.constant dense<0.000000e+00> : vector<8xf32>
    %7 = vector.multi_reduction <add>, %6, %cst_5 [1] : vector<8x32xf32> to vector<8xf32>
    %8 = vector.shape_cast %7 : vector<8xf32> to vector<8x1xf32>
    %9 = math.sqrt %8 : vector<8x1xf32>
    %cst_6 = arith.constant 1.000000e+00 : f32
    %10 = vector.broadcast %cst_6 : f32 to vector<8x1xf32>
    %11 = arith.subf %10, %9 : vector<8x1xf32>
    %cst_7 = arith.constant 0.000000e+00 : f32
    %12 = vector.broadcast %cst_7 : f32 to vector<8x1xf32>
    %13 = arith.maximumf %11, %12 : vector<8x1xf32>
    %14 = arith.mulf %13, %13 : vector<8x1xf32>
    %15 = arith.subf %14, %8 : vector<8x1xf32>
    %16 = vector.shape_cast %8 : vector<8x1xf32> to vector<1x8x1xf32>
    %cst_8 = arith.constant dense<0.000000e+00> : vector<1xf32>
    %17 = vector.multi_reduction <add>, %16, %cst_8 [1, 2] : vector<1x8x1xf32> to vector<1xf32>
    %18 = vector.shape_cast %17 : vector<1xf32> to vector<1x1x1xf32>
    %19 = vector.extract %18[0, 0, 0] : f32 from vector<1x1x1xf32>
    %cst_9 = arith.constant dense<0.000000e+00> : vector<1x1xf32>
    %20 = tpu.matmul %2, %15, %cst_9 {dimension_numbers = #tpu.dot_dimension_numbers<[1], [0], [0], [1], [0, 0, 1, 1], [], []>} : vector<1x8xf32>, vector<8x1xf32>, vector<1x1xf32> -> vector<1x1xf32>
    %21 = vector.extract %20[0, 0] : f32 from vector<1x1xf32>
    %22 = arith.addf %19, %21 : f32
    %23 = vector.broadcast %22 : f32 to vector<8x128xf32>
    %c0_10 = arith.constant 0 : index
    %c0_11 = arith.constant 0 : index
    %24 = vector.load %arg4[%c0_10, %c0_11] : memref<8x128xf32, #tpu.memory_space<vmem>>, vector<8x128xf32>
    tpu.vector_store %arg4[%c0_10, %c0_11], %23 {strides = array<i32>} : memref<8x128xf32, #tpu.memory_space<vmem>>, vector<8x128xf32>,
    return
  }
  func.func @transform_0(%arg0: i32) -> (i32, i32) {
    %c0_i32 = arith.constant 0 : i32
    %c0_i32_0 = arith.constant 0 : i32
    return %arg0, %c0_i32 : i32, i32
  }
  func.func @transform_1(%arg0: i32) -> (i32, i32) {
    %c0_i32 = arith.constant 0 : i32
    %c0_i32_0 = arith.constant 0 : i32
    return %arg0, %c0_i32 : i32, i32
  }
  func.func @transform_2(%arg0: i32) -> (i32, i32) {
    %c0_i32 = arith.constant 0 : i32
    %c0_i32_0 = arith.constant 0 : i32
    return %c0_i32, %arg0 : i32, i32
  }
  func.func @transform_3(%arg0: i32) -> (i32, i32) {
    %c0_i32 = arith.constant 0 : i32
    %c0_i32_0 = arith.constant 0 : i32
    return %arg0, %c0_i32 : i32, i32
  }
}

</mosaic_0001>

<llo_original>
// kernel: tpu_custom_call.1
$region0: #{tpu_custom_call.1}
  #allocation0 [shape = 'u32[]', space=smem, size = 0x4, offset = 0x4, fixed_abs, tag = 'smem constant byte address 0x4 - core index']
  #allocation1 [shape = 'u32[144,128]{1,0:T(1,128)}', space=vmem, size = 0x12000, scoped, tag = 'internal scratch']
  %s0 = inlined_call_operand.hbm [shape: f32[8,32], index: 0, kind: input, shape index: {}]
  %s1 = inlined_call_operand.hbm [shape: f32[8,32], index: 1, kind: input, shape index: {}]
  %s2 = inlined_call_operand.vmem [shape: f32[1,8], index: 2, kind: input, shape index: {}]
  %s3 = inlined_call_operand.hbm [shape: f32[8,128], index: 3, kind: output, shape index: {}]
  %s4 = sld [smem:[#allocation0]]
  $region30: #{tpu_custom_call.1} parent=0
    _
  %s6 = ssub.s32 1, %s4
  %s7 = scalar_select 0, %s6, %s4
  $region1: #{tpu_custom_call.1} parent=0
    #allocation2 [shape = 'u8[4096]{0}', space=vmem, size = 0x1000, scoped, tag = 'input window, operand 0, single buffered']
    #allocation3 [shape = 's32[1]{0}', space=sflag, size = 0x4, scoped, tag = 'scoped memory for tpu_custom_call.1']
    #allocation4 [shape = 's32[1]{0}', space=sflag, size = 0x4, scoped, tag = 'scoped memory for tpu_custom_call.1']
    #allocation5 [shape = 'u8[4096]{0}', space=vmem, size = 0x1000, scoped, tag = 'input window, operand 1, single buffered']
    #allocation6 [shape = 's32[1]{0}', space=sflag, size = 0x4, scoped, tag = 'scoped memory for tpu_custom_call.1']
    #allocation7 [shape = 'u8[4096]{0}', space=vmem, size = 0x1000, scoped, tag = 'output window, operand 0, single buffered']
    %8 = vsyncpa [#allocation3], 0
    %9 = vsyncpa [#allocation6], 0
    %10 = vsyncpa [#allocation4], 0
    // Predicated region
    $region2: #{tpu_custom_call.1} parent=1 // pred_check
      _
    $region3: #{tpu_custom_call.1} parent=1 // pred_check_branch
      %12 = sbr.rel (0) target = $region5
    $region4: #{tpu_custom_call.1} parent=1 // pred_region
      %s14 = ssub.s32 128, 128
      %15 = vsyncadd [#allocation3], %s14
      %s17 = sshll.u32 [#allocation2], 4
      %s18 = int_to_ptr.vmem [resolvable:$true] %s17
      %20 = dma.hbm_to_vmem [thread:$0]  %s0, 128, %s18, [#allocation3]
    $region5: #{tpu_custom_call.1} parent=1 // pred_fallthru
      _
    // Predicated region
    $region6: #{tpu_custom_call.1} parent=1 // pred_check
      _
    $region7: #{tpu_custom_call.1} parent=1 // pred_check_branch
      %22 = sbr.rel (0) target = $region9
    $region8: #{tpu_custom_call.1} parent=1 // pred_region
      %s24 = ssub.s32 128, 128
      %25 = vsyncadd [#allocation6], %s24
      %s27 = sshll.u32 [#allocation5], 4
      %s28 = int_to_ptr.vmem [resolvable:$true] %s27
      %30 = dma.hbm_to_vmem [thread:$0]  %s1, 128, %s28, [#allocation6]
    $region9: #{tpu_custom_call.1} parent=1 // pred_fallthru
      _
    // Predicated region
    $region10: #{tpu_custom_call.1} parent=1 // pred_check
      _
    $region11: #{tpu_custom_call.1} parent=1 // pred_check_branch
      %32 = sbr.rel (0) target = $region13
    $region12: #{tpu_custom_call.1} parent=1 // pred_region
      _
    $region13: #{tpu_custom_call.1} parent=1 // pred_fallthru
      _
    // Predicated region
    $region14: #{tpu_custom_call.1} parent=1 // pred_check
      _
    $region15: #{tpu_custom_call.1} parent=1 // pred_check_branch
      %34 = sbr.rel (0) target = $region17
    $region16: #{tpu_custom_call.1} parent=1 // pred_region
      %35 = dma.done [#allocation3], 128
    $region17: #{tpu_custom_call.1} parent=1 // pred_fallthru
      _
    // Predicated region
    $region18: #{tpu_custom_call.1} parent=1 // pred_check
      _
    $region19: #{tpu_custom_call.1} parent=1 // pred_check_branch
      %37 = sbr.rel (0) target = $region21
    $region20: #{tpu_custom_call.1} parent=1 // pred_region
      %38 = dma.done [#allocation6], 128
    $region21: #{tpu_custom_call.1} parent=1 // pred_fallthru
      _
    %v39 = vld [vmem:[#allocation2] sm:$0xff]
    %v40 = vld [vmem:[#allocation5] sm:$0xff]
    %v41 = vld [vmem:[%s2] sm:$0x1]
    %v42 = vsub.f32 %v39, %v40
    %v43 = vadd.f32 %v42, 1e-06
    %v44 = vmul.f32 %v43, %v43
    %vm45 = vcmask 261120
    %v46 = vsel %vm45, %v44, 0.0
    %47 = vadd.xlane.f32.xlu0 %v46
    %v48 = vpop.xlane.xlu0 %47
    %v49 = vrsqrt.pop %v48
    %v50 = vmul.f32 %v48, %v49
    %vm51 = vcmp.eq.f32.partialorder %v48, inf
    %v52 = vsel %vm51, %v48, %v50
    %vm53 = vcmp.eq.f32.partialorder %v48, 0.0
    %v54 = vand.u32 %v48, 2147483648
    %v55 = vsel %vm53, %v54, %v52
    %v56 = vsub.f32 1.0, %v55
    %v57 = vmax.f32 %v56, 0.0
    %v58 = vmul.f32 %v57, %v57
    %v59 = vsub.f32 %v58, %v48
    %vm60 = vcmask 7168
    %v61 = vsel %vm60, %v48, 0.0
    %62 = vadd.xlane.f32.xlu0 %v61
    %v63 = vpop.xlane.xlu0 %62
    %v64 = vrot.slane %v63, 4
    %v65 = vadd.f32 %v63, %v64
    %v66 = vrot.slane %v65, 2
    %v67 = vadd.f32 %v65, %v66
    %v68 = vrot.slane %v67, 1
    %v69 = vadd.f32 %v67, %v68
    %s70 = vtos %v69
    %vm71 = vcmask 64512
    %v73 = vsel %vm71, %v41, 0
    %75 = vmatprep.subr.mxu0 0.0
    %76 = vmatpush1.msra.mxu0 %v59
    %77 = vmatprep.subr.mxu0 0.0
    %78 = vmatpush1.msra.mxu0 0.0
    %79 = vmatprep.subr.mxu0 0.0
    %80 = vmatpush1.msra.mxu0 0.0
    %81 = vmatprep.subr.mxu0 0.0
    %82 = vmatpush1.msra.mxu0 0.0
    %83 = vmatprep.subr.mxu0 0.0
    %84 = vmatpush1.msra.mxu0 0.0
    %85 = vmatprep.subr.mxu0 0.0
    %86 = vmatpush1.msra.mxu0 0.0
    %87 = vmatprep.subr.mxu0 0.0
    %88 = vmatpush1.msra.mxu0 0.0
    %89 = vmatprep.subr.mxu0 0.0
    %90 = vmatpush1.msra.mxu0 0.0
    %91 = vmatprep.subr.mxu0 0.0
    %92 = vmatpush1.msra.mxu0 0.0
    %93 = vmatprep.subr.mxu0 0.0
    %94 = vmatpush1.msra.mxu0 0.0
    %95 = vmatprep.subr.mxu0 0.0
    %96 = vmatpush1.msra.mxu0 0.0
    %97 = vmatprep.subr.mxu0 0.0
    %98 = vmatpush1.msra.mxu0 0.0
    %99 = vmatprep.subr.mxu0 0.0
    %100 = vmatpush1.msra.mxu0 0.0
    %101 = vmatprep.subr.mxu0 0.0
    %102 = vmatpush1.msra.mxu0 0.0
    %103 = vmatprep.subr.mxu0 0.0
    %104 = vmatpush1.msra.mxu0 0.0
    %105 = vmatprep.subr.mxu0 0.0
    %106 = vmatpush1.msra.mxu0 0.0
    %107 = vmatprep.subr.mxu0 0.0
    %108 = vmatpush1.msra.mxu0 0.0
    %109 = vmatprep.subr.mxu0 0.0
    %110 = vmatpush1.msra.mxu0 0.0
    %111 = vmatprep.subr.mxu0 0.0
    %112 = vmatpush1.msra.mxu0 0.0
    %113 = vmatprep.subr.mxu0 0.0
    %114 = vmatpush1.msra.mxu0 0.0
    %115 = vmatprep.subr.mxu0 0.0
    %116 = vmatpush1.msra.mxu0 0.0
    %117 = vmatprep.subr.mxu0 0.0
    %118 = vmatpush1.msra.mxu0 0.0
    %119 = vmatprep.subr.mxu0 0.0
    %120 = vmatpush1.msra.mxu0 0.0
    %121 = vmatprep.subr.mxu0 0.0
    %122 = vmatpush1.msra.mxu0 0.0
    %123 = vmatprep.subr.mxu0 0.0
    %124 = vmatpush1.msra.mxu0 0.0
    %125 = vmatprep.subr.mxu0 0.0
    %126 = vmatpush1.msra.mxu0 0.0
    %127 = vmatprep.subr.mxu0 0.0
    %128 = vmatpush1.msra.mxu0 0.0
    %129 = vmatprep.subr.mxu0 0.0
    %130 = vmatpush1.msra.mxu0 0.0
    %131 = vmatprep.subr.mxu0 0.0
    %132 = vmatpush1.msra.mxu0 0.0
    %133 = vmatprep.subr.mxu0 0.0
    %134 = vmatpush1.msra.mxu0 0.0
    %135 = vmatprep.subr.mxu0 0.0
    %136 = vmatpush1.msra.mxu0 0.0
    %137 = vmatprep.subr.mxu0 0.0
    %138 = vmatpush1.msra.mxu0 0.0
    %139 = vmatprep.mubr.f32.mxu0 0.0
    %140 = vmatmul.mubr.f32.gmra.mrb[0].mxu0 %v73
    %v141 = vpop.f32.mrb[0].mxu0
    %v142 = vadd.f32 0.0, %v141
    %v143 = vpop.f32.mrb[0].mxu0
    %144 = vdwg.mxu0
    %s145 = vtos %v142
    %s146 = sadd.f32 %s70, %s145
    %v147 = vstv %s146
    %148 = vst [vmem:[#allocation7] sm:$0xff] %v147
    // Predicated region
    $region22: #{tpu_custom_call.1} parent=1 // pred_check
      _
    $region23: #{tpu_custom_call.1} parent=1 // pred_check_branch
      %150 = sbr.rel (0) target = $region25
    $region24: #{tpu_custom_call.1} parent=1 // pred_region
      %s152 = ssub.s32 128, 128
      %153 = vsyncadd [#allocation4], %s152
      %s155 = sshll.u32 [#allocation7], 4
      %s156 = int_to_ptr.vmem [resolvable:$true] %s155
      %158 = dma.vmem_to_hbm [thread:$0]  %s156, 128, %s3, [#allocation4]
    $region25: #{tpu_custom_call.1} parent=1 // pred_fallthru
      _
    // Predicated region
    $region26: #{tpu_custom_call.1} parent=1 // pred_check
      _
    $region27: #{tpu_custom_call.1} parent=1 // pred_check_branch
      %160 = sbr.rel (0) target = $region29
    $region28: #{tpu_custom_call.1} parent=1 // pred_region
      %161 = dma.done [#allocation4], 128
    $region29: #{tpu_custom_call.1} parent=1 // pred_fallthru
      _
    %162 = vsyncpa [#allocation3], 1
    %163 = vsyncpa [#allocation6], 1
    %164 = vsyncpa [#allocation4], 1

</llo_original>
